<compile_context>
chip_gen: v7x
topology: tpu7x:2x2x1
jax: 0.10.0
libtpu: 0.0.40
codegen_flags: <defaults>
</compile_context>

<pallas_src>
import functools

import jax
import jax.numpy as jnp
from jax.experimental import pallas as pl
from jax.experimental.pallas import tpu as pltpu

LN_EPS = 1e-5   # PyTorch nn.LayerNorm default
LANE = 128
SUBLANE = 8


def _round_up(n, m):
    return ((n + m - 1) // m) * m


# ----------------------------------------------------------------------------
# Kernel
# ----------------------------------------------------------------------------
def _masked_layer_norm(t, gamma, beta, mask, inv_n):
    """LayerNorm over the last axis where only `mask`-ed lanes are real.

    Real lanes carry data, padded lanes of `t` are exactly zero; gamma/beta are
    zero on padded lanes, so the result is exactly zero there as well.
    Statistics divide by the *real* feature count (inv_n = 1/H), matching
    nn.LayerNorm's biased variance.
    """
    mu = jnp.sum(t, axis=-1, keepdims=True) * inv_n
    d = (t - mu) * mask
    var = jnp.sum(d * d, axis=-1, keepdims=True) * inv_n
    return d * jax.lax.rsqrt(var + LN_EPS) * gamma + beta


def _lstm_seq_kernel(x_ref, h0_ref, c0_ref, w_ref,
                     gln_w_ref, gln_b_ref, cln_w_ref, cln_b_ref,
                     hs_ref, c_out_ref,
                     xh_buf, c_state,
                     *, hidden_size, input_p):
    """One (batch_tile, timestep) grid point.

    x_ref     : (1, TB, In_p)   current timestep's input block (streamed)
    h0_ref    : (TB, Hp)        initial hidden (used at t == 0)
    c0_ref    : (TB, Hp)        initial cell   (used at t == 0)
    w_ref     : (Kp, 4*Hp)      fused [Wx; Wh], VMEM-resident across the grid
    gln_*_ref : (1, 4*Hp)       f,i,o,u LayerNorm affine (zero on padded lanes)
    cln_*_ref : (1, Hp)         cell LayerNorm affine
    hs_ref    : (1, TB, Hp)     per-step hidden output
    c_out_ref : (TB, Hp)        final cell output (written on last step)
    xh_buf    : scratch (TB, Kp)  fused [x | h] buffer (h carried in place)
    c_state   : scratch (TB, Hp)  cell state carry
    """
    t = pl.program_id(1)
    Hp = c_state.shape[1]
    inv_h = 1.0 / hidden_size
    mask = (jax.lax.broadcasted_iota(jnp.int32, (1, Hp), 1)
            < hidden_size).astype(jnp.float32)

    @pl.when(t == 0)
    def _init():
        xh_buf[:, input_p:] = h0_ref[...].astype(jnp.float32)
        c_state[...] = c0_ref[...].astype(jnp.float32)

    # Stream the current timestep's input into the fused [x | h] buffer.
    xh_buf[:, :input_p] = x_ref[0].astype(jnp.float32)

    # Single MXU pass: lin = [x, h] @ W  (f32 accumulation).
    lin = jnp.dot(xh_buf[...], w_ref[...], preferred_element_type=jnp.float32)

    def gate(k):  # gate blocks are 128-aligned lane slices -> no relayout
        blk = lin[:, k * Hp:(k + 1) * Hp]
        g = gln_w_ref[:, k * Hp:(k + 1) * Hp]
        b = gln_b_ref[:, k * Hp:(k + 1) * Hp]
        return _masked_layer_norm(blk, g, b, mask, inv_h)

    f = jax.nn.sigmoid(gate(0))
    i = jax.nn.sigmoid(gate(1))
    o = jax.nn.sigmoid(gate(2))
    u = jnp.tanh(gate(3))            # dropout=None -> identity

    c_new = _masked_layer_norm(i * u + f * c_state[...],
                               cln_w_ref[...], cln_b_ref[...], mask, inv_h)
    h_new = o * jnp.tanh(c_new)

    # Carry state to the next timestep (in VMEM, no HBM round-trip).
    c_state[...] = c_new
    xh_buf[:, input_p:] = h_new

    hs_ref[0] = h_new.astype(hs_ref.dtype)

    @pl.when(t == pl.num_programs(1) - 1)
    def _final():
        c_out_ref[...] = c_new.astype(c_out_ref.dtype)


# ----------------------------------------------------------------------------
# Wrappers
# ----------------------------------------------------------------------------
def pack_params(params, input_size, hidden_size):
    """One-time packing of parameters into lane-dense, fused buffers."""
    in_p = _round_up(input_size, LANE)
    hid_p = _round_up(hidden_size, LANE)
    kp = in_p + hid_p
    w = jnp.zeros((kp, 4 * hid_p), jnp.float32)
    gw = jnp.zeros((1, 4 * hid_p), jnp.float32)
    gb = jnp.zeros((1, 4 * hid_p), jnp.float32)
    for k in range(4):
        cs, ce = k * hid_p, k * hid_p + hidden_size
        w = w.at[:input_size, cs:ce].set(
            params["wx"][:, k * hidden_size:(k + 1) * hidden_size])
        w = w.at[in_p:in_p + hidden_size, cs:ce].set(
            params["wh"][:, k * hidden_size:(k + 1) * hidden_size])
        gw = gw.at[0, cs:ce].set(params["gate_ln_w"][k])
        gb = gb.at[0, cs:ce].set(params["gate_ln_b"][k])
    cw = jnp.zeros((1, hid_p), jnp.float32).at[0, :hidden_size].set(
        params["cell_ln_w"][0])
    cb = jnp.zeros((1, hid_p), jnp.float32).at[0, :hidden_size].set(
        params["cell_ln_b"][0])
    return {"w": w, "gln_w": gw, "gln_b": gb, "cln_w": cw, "cln_b": cb,
            "input_size": input_size, "hidden_size": hidden_size,
            "input_p": in_p, "hidden_p": hid_p}


def layer_norm_lstm_sequence(xs, state, packed, *, batch_tile=None):
    """Run the cell over a whole sequence in ONE pallas_call.

    xs: (T, B, input_size); state = (h0, c0), each (B, hidden).
    Returns (hs, c_T): hs (T, B, hidden), c_T (B, hidden).
    """
    h0, c0 = state
    T, B, In = xs.shape
    H = packed["hidden_size"]
    in_p, hid_p = packed["input_p"], packed["hidden_p"]
    kp = in_p + hid_p

    tb = batch_tile if batch_tile is not None else min(256, _round_up(B, SUBLANE))
    bp = _round_up(B, tb)

    xs_p = jnp.zeros((T, bp, in_p), jnp.float32).at[:, :B, :In].set(xs)
    h0_p = jnp.zeros((bp, hid_p), jnp.float32).at[:B, :H].set(h0)
    c0_p = jnp.zeros((bp, hid_p), jnp.float32).at[:B, :H].set(c0)

    kernel = functools.partial(_lstm_seq_kernel, hidden_size=H, input_p=in_p)

    hs_p, c_p = pl.pallas_call(
        kernel,
        out_shape=(jax.ShapeDtypeStruct((T, bp, hid_p), h0.dtype),
                   jax.ShapeDtypeStruct((bp, hid_p), c0.dtype)),
        grid_spec=pltpu.PrefetchScalarGridSpec(
            num_scalar_prefetch=0,
            grid=(bp // tb, T),                       # (batch tiles, time)
            in_specs=[
                pl.BlockSpec((1, tb, in_p), lambda b, t: (t, b, 0)),   # x_t
                pl.BlockSpec((tb, hid_p), lambda b, t: (b, 0)),        # h0
                pl.BlockSpec((tb, hid_p), lambda b, t: (b, 0)),        # c0
                pl.BlockSpec((kp, 4 * hid_p), lambda b, t: (0, 0)),    # W (resident)
                pl.BlockSpec((1, 4 * hid_p), lambda b, t: (0, 0)),     # gate LN w
                pl.BlockSpec((1, 4 * hid_p), lambda b, t: (0, 0)),     # gate LN b
                pl.BlockSpec((1, hid_p), lambda b, t: (0, 0)),         # cell LN w
                pl.BlockSpec((1, hid_p), lambda b, t: (0, 0)),         # cell LN b
            ],
            out_specs=[
                pl.BlockSpec((1, tb, hid_p), lambda b, t: (t, b, 0)),  # hs
                pl.BlockSpec((tb, hid_p), lambda b, t: (b, 0)),        # c_T
            ],
            scratch_shapes=[
                pltpu.VMEM((tb, kp), jnp.float32),      # fused [x | h] buffer
                pltpu.VMEM((tb, hid_p), jnp.float32),   # cell state carry
            ],
        ),
        compiler_params=pltpu.CompilerParams(
            dimension_semantics=("parallel", "arbitrary"),
            vmem_limit_bytes=48 * 1024 * 1024,          # > default, < v7x 64 MiB
        ),
    )(xs_p, h0_p, c0_p, packed["w"],
      packed["gln_w"], packed["gln_b"], packed["cln_w"], packed["cln_b"])

    return hs_p[:, :B, :H], c_p[:B, :H]


def layer_norm_lstm_cell(x, state, packed, **kwargs):
    """Single-step cell == the PyTorch module's forward. Returns (h', c')."""
    hs, c_new = layer_norm_lstm_sequence(x[None], state, packed, **kwargs)
    return hs[0], c_new


# ----------------------------------------------------------------------------
# Parameters + pure-JAX reference
# ----------------------------------------------------------------------------
def init_params(key, input_size, hidden_size, dtype=jnp.float32):
    k_w, k_gw, k_gb, k_cw, k_cb = jax.random.split(key, 5)
    fan_in = input_size + hidden_size
    bound = 1.0 / jnp.sqrt(fan_in)
    w_t = jax.random.uniform(k_w, (fan_in, 4 * hidden_size),
                             minval=-bound, maxval=bound, dtype=dtype)
    return {
        "wx": w_t[:input_size, :],                       # (In, 4H)
        "wh": w_t[input_size:, :],                       # (H, 4H)
        "gate_ln_w": 1.0 + 0.1 * jax.random.normal(k_gw, (4, hidden_size), dtype),
        "gate_ln_b": 0.1 * jax.random.normal(k_gb, (4, hidden_size), dtype),
        "cell_ln_w": 1.0 + 0.1 * jax.random.normal(k_cw, (1, hidden_size), dtype),
        "cell_ln_b": 0.1 * jax.random.normal(k_cb, (1, hidden_size), dtype),
    }


def _layer_norm_ref(t, gamma, beta):
    mu = jnp.mean(t, axis=-1, keepdims=True)
    var = jnp.mean((t - mu) ** 2, axis=-1, keepdims=True)
    return (t - mu) * jax.lax.rsqrt(var + LN_EPS) * gamma + beta


def reference_forward(x, state, params):
    h, c = state
    lin = jnp.concatenate([x, h], axis=1) @ jnp.concatenate(
        [params["wx"], params["wh"]], axis=0)
    H = h.shape[1]
    chunks = [lin[:, k * H:(k + 1) * H] for k in range(4)]
    normed = [_layer_norm_ref(t, params["gate_ln_w"][k], params["gate_ln_b"][k])
              for k, t in enumerate(chunks)]
    f, i, o = (jax.nn.sigmoid(t) for t in normed[:3])
    u = jnp.tanh(normed[3])
    c_new = _layer_norm_ref(i * u + f * c,
                            params["cell_ln_w"][0], params["cell_ln_b"][0])
    return o * jnp.tanh(c_new), c_new


# ----------------------------------------------------------------------------
# Demo / check
# ----------------------------------------------------------------------------
if __name__ == "__main__":
    B, INPUT_SIZE, HIDDEN, T = 2, 16, 32, 8

    key = jax.random.PRNGKey(0)
    k_x, k_h, k_c, k_p = jax.random.split(key, 4)
    xs = jax.random.normal(k_x, (T, B, INPUT_SIZE), jnp.float32)
    h0 = jax.random.normal(k_h, (B, HIDDEN), jnp.float32)
    c0 = jax.random.normal(k_c, (B, HIDDEN), jnp.float32)
    params = init_params(k_p, INPUT_SIZE, HIDDEN)
    packed = pack_params(params, INPUT_SIZE, HIDDEN)

    # 1) single-step cell — the module's forward
    h1, c1 = layer_norm_lstm_cell(xs[0], (h0, c0), packed)
    jax.block_until_ready((h1, c1))
    h1_ref, c1_ref = reference_forward(xs[0], (h0, c0), params)
    assert jnp.allclose(h1, h1_ref, atol=1e-4, rtol=1e-4), "cell h mismatch"
    assert jnp.allclose(c1, c1_ref, atol=1e-4, rtol=1e-4), "cell c mismatch"

    # 2) fused multi-timestep call (weights resident, state carried in VMEM)
    hs, c_last = layer_norm_lstm_sequence(xs, (h0, c0), packed)
    jax.block_until_ready((hs, c_last))

    def scan_ref(carry, x_t):
        h_new, c_new = reference_forward(x_t, carry, params)
        return (h_new, c_new), h_new

    (h_fin_ref, c_fin_ref), hs_ref = jax.lax.scan(scan_ref, (h0, c0), xs)
    assert jnp.allclose(hs, hs_ref, atol=1e-4, rtol=1e-4), "sequence h mismatch"
    assert jnp.allclose(c_last, c_fin_ref, atol=1e-4, rtol=1e-4), "sequence c mismatch"

    print("KERNEL_OK")
</pallas_src>

<mosaic_0001>
module attributes {stable_mosaic.version = 11 : i64} {
  func.func @_lstm_seq_kernel(%arg0: i32, %arg1: i32, %arg2: memref<1x8x128xf32, #tpu.memory_space<vmem>>, %arg3: memref<8x128xf32, #tpu.memory_space<vmem>>, %arg4: memref<8x128xf32, #tpu.memory_space<vmem>>, %arg5: memref<256x512xf32, #tpu.memory_space<vmem>>, %arg6: memref<1x512xf32, #tpu.memory_space<vmem>>, %arg7: memref<1x512xf32, #tpu.memory_space<vmem>>, %arg8: memref<1x128xf32, #tpu.memory_space<vmem>>, %arg9: memref<1x128xf32, #tpu.memory_space<vmem>>, %arg10: memref<1x8x128xf32, #tpu.memory_space<vmem>>, %arg11: memref<8x128xf32, #tpu.memory_space<vmem>>, %arg12: memref<8x256xf32, #tpu.memory_space<vmem>>, %arg13: memref<8x128xf32, #tpu.memory_space<vmem>>) attributes {dimension_semantics = [#tpu.dimension_semantics<parallel>, #tpu.dimension_semantics<arbitrary>], iteration_bounds = array<i64: 1, 1>, scalar_prefetch = 0 : i64, scratch_operands = 2 : i64, tpu.core_type = #tpu.core_type<tc>, window_params = [{transform_indices = @transform_0, window_bounds = array<i64: 1, 8, 128>}, {transform_indices = @transform_1, window_bounds = array<i64: 8, 128>}, {transform_indices = @transform_2, window_bounds = array<i64: 8, 128>}, {pipeline_mode = #tpu.pipeline_mode<synchronous>, transform_indices = @transform_3, window_bounds = array<i64: 256, 512>}, {pipeline_mode = #tpu.pipeline_mode<synchronous>, transform_indices = @transform_4, window_bounds = array<i64: 1, 512>}, {pipeline_mode = #tpu.pipeline_mode<synchronous>, transform_indices = @transform_5, window_bounds = array<i64: 1, 512>}, {pipeline_mode = #tpu.pipeline_mode<synchronous>, transform_indices = @transform_6, window_bounds = array<i64: 1, 128>}, {pipeline_mode = #tpu.pipeline_mode<synchronous>, transform_indices = @transform_7, window_bounds = array<i64: 1, 128>}, {transform_indices = @transform_8, window_bounds = array<i64: 1, 8, 128>}, {transform_indices = @transform_9, window_bounds = array<i64: 8, 128>}]} {
    %0 = tpu.iota {dimensions = array<i32: 1>} : vector<1x128xi32>
    %c32_i32 = arith.constant 32 : i32
    %1 = vector.broadcast %c32_i32 : i32 to vector<1x128xi32>
    %2 = arith.cmpi slt, %0, %1 : vector<1x128xi32>
    %3 = arith.extui %2 : vector<1x128xi1> to vector<1x128xi32>
    %4 = arith.sitofp %3 : vector<1x128xi32> to vector<1x128xf32>
    %c0_i32 = arith.constant 0 : i32
    %5 = arith.cmpi eq, %arg1, %c0_i32 : i32
    %6 = arith.extui %5 : i1 to i32
    %c0_i32_0 = arith.constant 0 : i32
    %7 = arith.cmpi ne, %6, %c0_i32_0 : i32
    scf.if %7 {
      %c0_65 = arith.constant 0 : index
      %c0_66 = arith.constant 0 : index
      %168 = vector.load %arg3[%c0_65, %c0_66] : memref<8x128xf32, #tpu.memory_space<vmem>>, vector<8x128xf32>
      %c0_67 = arith.constant 0 : index
      %c128_68 = arith.constant 128 : index
      %169 = vector.load %arg12[%c0_67, %c128_68] : memref<8x256xf32, #tpu.memory_space<vmem>>, vector<8x128xf32>
      tpu.vector_store %arg12[%c0_67, %c128_68], %168 {strides = array<i32>} : memref<8x256xf32, #tpu.memory_space<vmem>>, vector<8x128xf32>,
      %c0_69 = arith.constant 0 : index
      %c0_70 = arith.constant 0 : index
      %170 = vector.load %arg4[%c0_69, %c0_70] : memref<8x128xf32, #tpu.memory_space<vmem>>, vector<8x128xf32>
      %c0_71 = arith.constant 0 : index
      %c0_72 = arith.constant 0 : index
      %171 = vector.load %arg13[%c0_71, %c0_72] : memref<8x128xf32, #tpu.memory_space<vmem>>, vector<8x128xf32>
      tpu.vector_store %arg13[%c0_71, %c0_72], %170 {strides = array<i32>} : memref<8x128xf32, #tpu.memory_space<vmem>>, vector<8x128xf32>,
    } else {
    }
    %c0 = arith.constant 0 : index
    %c0_1 = arith.constant 0 : index
    %c0_2 = arith.constant 0 : index
    %8 = vector.load %arg2[%c0, %c0_1, %c0_2] : memref<1x8x128xf32, #tpu.memory_space<vmem>>, vector<1x8x128xf32>
    %9 = vector.shape_cast %8 : vector<1x8x128xf32> to vector<8x128xf32>
    %c0_3 = arith.constant 0 : index
    %c0_4 = arith.constant 0 : index
    %10 = vector.load %arg12[%c0_3, %c0_4] : memref<8x256xf32, #tpu.memory_space<vmem>>, vector<8x128xf32>
    tpu.vector_store %arg12[%c0_3, %c0_4], %9 {strides = array<i32>} : memref<8x256xf32, #tpu.memory_space<vmem>>, vector<8x128xf32>,
    %c0_5 = arith.constant 0 : index
    %c0_6 = arith.constant 0 : index
    %11 = vector.load %arg12[%c0_5, %c0_6] : memref<8x256xf32, #tpu.memory_space<vmem>>, vector<8x256xf32>
    %c0_7 = arith.constant 0 : index
    %c0_8 = arith.constant 0 : index
    %12 = vector.load %arg5[%c0_7, %c0_8] : memref<256x512xf32, #tpu.memory_space<vmem>>, vector<256x512xf32>
    %cst = arith.constant dense<0.000000e+00> : vector<8x512xf32>
    %13 = tpu.matmul %11, %12, %cst {dimension_numbers = #tpu.dot_dimension_numbers<[1], [0], [0], [1], [0, 0, 1, 1], [], []>} : vector<8x256xf32>, vector<256x512xf32>, vector<8x512xf32> -> vector<8x512xf32>
    %14 = vector.extract_strided_slice %13 {offsets = [0, 0], sizes = [8, 128], strides = [1, 1]} : vector<8x512xf32> to vector<8x128xf32>
    %c0_9 = arith.constant 0 : index
    %c0_10 = arith.constant 0 : index
    %15 = vector.load %arg6[%c0_9, %c0_10] : memref<1x512xf32, #tpu.memory_space<vmem>>, vector<1x128xf32>
    %c0_11 = arith.constant 0 : index
    %c0_12 = arith.constant 0 : index
    %16 = vector.load %arg7[%c0_11, %c0_12] : memref<1x512xf32, #tpu.memory_space<vmem>>, vector<1x128xf32>
    %cst_13 = arith.constant dense<0.000000e+00> : vector<8xf32>
    %17 = vector.multi_reduction <add>, %14, %cst_13 [1] : vector<8x128xf32> to vector<8xf32>
    %18 = vector.shape_cast %17 : vector<8xf32> to vector<8x1xf32>
    %cst_14 = arith.constant 3.125000e-02 : f32
    %19 = vector.broadcast %cst_14 : f32 to vector<8x1xf32>
    %20 = arith.mulf %18, %19 : vector<8x1xf32>
    %21 = vector.broadcast %20 : vector<8x1xf32> to vector<8x128xf32>
    %22 = arith.subf %14, %21 : vector<8x128xf32>
    %23 = vector.broadcast %4 : vector<1x128xf32> to vector<8x128xf32>
    %24 = arith.mulf %22, %23 : vector<8x128xf32>
    %25 = arith.mulf %24, %24 : vector<8x128xf32>
    %cst_15 = arith.constant dense<0.000000e+00> : vector<8xf32>
    %26 = vector.multi_reduction <add>, %25, %cst_15 [1] : vector<8x128xf32> to vector<8xf32>
    %27 = vector.shape_cast %26 : vector<8xf32> to vector<8x1xf32>
    %cst_16 = arith.constant 3.125000e-02 : f32
    %28 = vector.broadcast %cst_16 : f32 to vector<8x1xf32>
    %29 = arith.mulf %27, %28 : vector<8x1xf32>
    %cst_17 = arith.constant 9.99999974E-6 : f32
    %30 = vector.broadcast %cst_17 : f32 to vector<8x1xf32>
    %31 = arith.addf %29, %30 : vector<8x1xf32>
    %32 = math.rsqrt %31 : vector<8x1xf32>
    %33 = vector.broadcast %32 : vector<8x1xf32> to vector<8x128xf32>
    %34 = arith.mulf %24, %33 : vector<8x128xf32>
    %35 = vector.broadcast %15 : vector<1x128xf32> to vector<8x128xf32>
    %36 = arith.mulf %34, %35 : vector<8x128xf32>
    %37 = vector.broadcast %16 : vector<1x128xf32> to vector<8x128xf32>
    %38 = arith.addf %36, %37 : vector<8x128xf32>
    %39 = arith.negf %38 : vector<8x128xf32>
    %40 = math.exp %39 : vector<8x128xf32>
    %cst_18 = arith.constant 1.000000e+00 : f32
    %41 = vector.broadcast %cst_18 : f32 to vector<8x128xf32>
    %42 = arith.addf %41, %40 : vector<8x128xf32>
    %43 = arith.divf %41, %42 : vector<8x128xf32>
    %44 = vector.extract_strided_slice %13 {offsets = [0, 128], sizes = [8, 128], strides = [1, 1]} : vector<8x512xf32> to vector<8x128xf32>
    %c0_19 = arith.constant 0 : index
    %c128 = arith.constant 128 : index
    %45 = vector.load %arg6[%c0_19, %c128] : memref<1x512xf32, #tpu.memory_space<vmem>>, vector<1x128xf32>
    %c0_20 = arith.constant 0 : index
    %c128_21 = arith.constant 128 : index
    %46 = vector.load %arg7[%c0_20, %c128_21] : memref<1x512xf32, #tpu.memory_space<vmem>>, vector<1x128xf32>
    %cst_22 = arith.constant dense<0.000000e+00> : vector<8xf32>
    %47 = vector.multi_reduction <add>, %44, %cst_22 [1] : vector<8x128xf32> to vector<8xf32>
    %48 = vector.shape_cast %47 : vector<8xf32> to vector<8x1xf32>
    %cst_23 = arith.constant 3.125000e-02 : f32
    %49 = vector.broadcast %cst_23 : f32 to vector<8x1xf32>
    %50 = arith.mulf %48, %49 : vector<8x1xf32>
    %51 = vector.broadcast %50 : vector<8x1xf32> to vector<8x128xf32>
    %52 = arith.subf %44, %51 : vector<8x128xf32>
    %53 = vector.broadcast %4 : vector<1x128xf32> to vector<8x128xf32>
    %54 = arith.mulf %52, %53 : vector<8x128xf32>
    %55 = arith.mulf %54, %54 : vector<8x128xf32>
    %cst_24 = arith.constant dense<0.000000e+00> : vector<8xf32>
    %56 = vector.multi_reduction <add>, %55, %cst_24 [1] : vector<8x128xf32> to vector<8xf32>
    %57 = vector.shape_cast %56 : vector<8xf32> to vector<8x1xf32>
    %cst_25 = arith.constant 3.125000e-02 : f32
    %58 = vector.broadcast %cst_25 : f32 to vector<8x1xf32>
    %59 = arith.mulf %57, %58 : vector<8x1xf32>
    %cst_26 = arith.constant 9.99999974E-6 : f32
    %60 = vector.broadcast %cst_26 : f32 to vector<8x1xf32>
    %61 = arith.addf %59, %60 : vector<8x1xf32>
    %62 = math.rsqrt %61 : vector<8x1xf32>
    %63 = vector.broadcast %62 : vector<8x1xf32> to vector<8x128xf32>
    %64 = arith.mulf %54, %63 : vector<8x128xf32>
    %65 = vector.broadcast %45 : vector<1x128xf32> to vector<8x128xf32>
    %66 = arith.mulf %64, %65 : vector<8x128xf32>
    %67 = vector.broadcast %46 : vector<1x128xf32> to vector<8x128xf32>
    %68 = arith.addf %66, %67 : vector<8x128xf32>
    %69 = arith.negf %68 : vector<8x128xf32>
    %70 = math.exp %69 : vector<8x128xf32>
    %cst_27 = arith.constant 1.000000e+00 : f32
    %71 = vector.broadcast %cst_27 : f32 to vector<8x128xf32>
    %72 = arith.addf %71, %70 : vector<8x128xf32>
    %73 = arith.divf %71, %72 : vector<8x128xf32>
    %74 = vector.extract_strided_slice %13 {offsets = [0, 256], sizes = [8, 128], strides = [1, 1]} : vector<8x512xf32> to vector<8x128xf32>
    %c0_28 = arith.constant 0 : index
    %c256 = arith.constant 256 : index
    %75 = vector.load %arg6[%c0_28, %c256] : memref<1x512xf32, #tpu.memory_space<vmem>>, vector<1x128xf32>
    %c0_29 = arith.constant 0 : index
    %c256_30 = arith.constant 256 : index
    %76 = vector.load %arg7[%c0_29, %c256_30] : memref<1x512xf32, #tpu.memory_space<vmem>>, vector<1x128xf32>
    %cst_31 = arith.constant dense<0.000000e+00> : vector<8xf32>
    %77 = vector.multi_reduction <add>, %74, %cst_31 [1] : vector<8x128xf32> to vector<8xf32>
    %78 = vector.shape_cast %77 : vector<8xf32> to vector<8x1xf32>
    %cst_32 = arith.constant 3.125000e-02 : f32
    %79 = vector.broadcast %cst_32 : f32 to vector<8x1xf32>
    %80 = arith.mulf %78, %79 : vector<8x1xf32>
    %81 = vector.broadcast %80 : vector<8x1xf32> to vector<8x128xf32>
    %82 = arith.subf %74, %81 : vector<8x128xf32>
    %83 = vector.broadcast %4 : vector<1x128xf32> to vector<8x128xf32>
    %84 = arith.mulf %82, %83 : vector<8x128xf32>
    %85 = arith.mulf %84, %84 : vector<8x128xf32>
    %cst_33 = arith.constant dense<0.000000e+00> : vector<8xf32>
    %86 = vector.multi_reduction <add>, %85, %cst_33 [1] : vector<8x128xf32> to vector<8xf32>
    %87 = vector.shape_cast %86 : vector<8xf32> to vector<8x1xf32>
    %cst_34 = arith.constant 3.125000e-02 : f32
    %88 = vector.broadcast %cst_34 : f32 to vector<8x1xf32>
    %89 = arith.mulf %87, %88 : vector<8x1xf32>
    %cst_35 = arith.constant 9.99999974E-6 : f32
    %90 = vector.broadcast %cst_35 : f32 to vector<8x1xf32>
    %91 = arith.addf %89, %90 : vector<8x1xf32>
    %92 = math.rsqrt %91 : vector<8x1xf32>
    %93 = vector.broadcast %92 : vector<8x1xf32> to vector<8x128xf32>
    %94 = arith.mulf %84, %93 : vector<8x128xf32>
    %95 = vector.broadcast %75 : vector<1x128xf32> to vector<8x128xf32>
    %96 = arith.mulf %94, %95 : vector<8x128xf32>
    %97 = vector.broadcast %76 : vector<1x128xf32> to vector<8x128xf32>
    %98 = arith.addf %96, %97 : vector<8x128xf32>
    %99 = arith.negf %98 : vector<8x128xf32>
    %100 = math.exp %99 : vector<8x128xf32>
    %cst_36 = arith.constant 1.000000e+00 : f32
    %101 = vector.broadcast %cst_36 : f32 to vector<8x128xf32>
    %102 = arith.addf %101, %100 : vector<8x128xf32>
    %103 = arith.divf %101, %102 : vector<8x128xf32>
    %104 = vector.extract_strided_slice %13 {offsets = [0, 384], sizes = [8, 128], strides = [1, 1]} : vector<8x512xf32> to vector<8x128xf32>
    %c0_37 = arith.constant 0 : index
    %c384 = arith.constant 384 : index
    %105 = vector.load %arg6[%c0_37, %c384] : memref<1x512xf32, #tpu.memory_space<vmem>>, vector<1x128xf32>
    %c0_38 = arith.constant 0 : index
    %c384_39 = arith.constant 384 : index
    %106 = vector.load %arg7[%c0_38, %c384_39] : memref<1x512xf32, #tpu.memory_space<vmem>>, vector<1x128xf32>
    %cst_40 = arith.constant dense<0.000000e+00> : vector<8xf32>
    %107 = vector.multi_reduction <add>, %104, %cst_40 [1] : vector<8x128xf32> to vector<8xf32>
    %108 = vector.shape_cast %107 : vector<8xf32> to vector<8x1xf32>
    %cst_41 = arith.constant 3.125000e-02 : f32
    %109 = vector.broadcast %cst_41 : f32 to vector<8x1xf32>
    %110 = arith.mulf %108, %109 : vector<8x1xf32>
    %111 = vector.broadcast %110 : vector<8x1xf32> to vector<8x128xf32>
    %112 = arith.subf %104, %111 : vector<8x128xf32>
    %113 = vector.broadcast %4 : vector<1x128xf32> to vector<8x128xf32>
    %114 = arith.mulf %112, %113 : vector<8x128xf32>
    %115 = arith.mulf %114, %114 : vector<8x128xf32>
    %cst_42 = arith.constant dense<0.000000e+00> : vector<8xf32>
    %116 = vector.multi_reduction <add>, %115, %cst_42 [1] : vector<8x128xf32> to vector<8xf32>
    %117 = vector.shape_cast %116 : vector<8xf32> to vector<8x1xf32>
    %cst_43 = arith.constant 3.125000e-02 : f32
    %118 = vector.broadcast %cst_43 : f32 to vector<8x1xf32>
    %119 = arith.mulf %117, %118 : vector<8x1xf32>
    %cst_44 = arith.constant 9.99999974E-6 : f32
    %120 = vector.broadcast %cst_44 : f32 to vector<8x1xf32>
    %121 = arith.addf %119, %120 : vector<8x1xf32>
    %122 = math.rsqrt %121 : vector<8x1xf32>
    %123 = vector.broadcast %122 : vector<8x1xf32> to vector<8x128xf32>
    %124 = arith.mulf %114, %123 : vector<8x128xf32>
    %125 = vector.broadcast %105 : vector<1x128xf32> to vector<8x128xf32>
    %126 = arith.mulf %124, %125 : vector<8x128xf32>
    %127 = vector.broadcast %106 : vector<1x128xf32> to vector<8x128xf32>
    %128 = arith.addf %126, %127 : vector<8x128xf32>
    %129 = math.tanh %128 : vector<8x128xf32>
    %130 = arith.mulf %73, %129 : vector<8x128xf32>
    %c0_45 = arith.constant 0 : index
    %c0_46 = arith.constant 0 : index
    %131 = vector.load %arg13[%c0_45, %c0_46] : memref<8x128xf32, #tpu.memory_space<vmem>>, vector<8x128xf32>
    %132 = arith.mulf %43, %131 : vector<8x128xf32>
    %133 = arith.addf %130, %132 : vector<8x128xf32>
    %c0_47 = arith.constant 0 : index
    %c0_48 = arith.constant 0 : index
    %134 = vector.load %arg8[%c0_47, %c0_48] : memref<1x128xf32, #tpu.memory_space<vmem>>, vector<1x128xf32>
    %c0_49 = arith.constant 0 : index
    %c0_50 = arith.constant 0 : index
    %135 = vector.load %arg9[%c0_49, %c0_50] : memref<1x128xf32, #tpu.memory_space<vmem>>, vector<1x128xf32>
    %cst_51 = arith.constant dense<0.000000e+00> : vector<8xf32>
    %136 = vector.multi_reduction <add>, %133, %cst_51 [1] : vector<8x128xf32> to vector<8xf32>
    %137 = vector.shape_cast %136 : vector<8xf32> to vector<8x1xf32>
    %cst_52 = arith.constant 3.125000e-02 : f32
    %138 = vector.broadcast %cst_52 : f32 to vector<8x1xf32>
    %139 = arith.mulf %137, %138 : vector<8x1xf32>
    %140 = vector.broadcast %139 : vector<8x1xf32> to vector<8x128xf32>
    %141 = arith.subf %133, %140 : vector<8x128xf32>
    %142 = vector.broadcast %4 : vector<1x128xf32> to vector<8x128xf32>
    %143 = arith.mulf %141, %142 : vector<8x128xf32>
    %144 = arith.mulf %143, %143 : vector<8x128xf32>
    %cst_53 = arith.constant dense<0.000000e+00> : vector<8xf32>
    %145 = vector.multi_reduction <add>, %144, %cst_53 [1] : vector<8x128xf32> to vector<8xf32>
    %146 = vector.shape_cast %145 : vector<8xf32> to vector<8x1xf32>
    %cst_54 = arith.constant 3.125000e-02 : f32
    %147 = vector.broadcast %cst_54 : f32 to vector<8x1xf32>
    %148 = arith.mulf %146, %147 : vector<8x1xf32>
    %cst_55 = arith.constant 9.99999974E-6 : f32
    %149 = vector.broadcast %cst_55 : f32 to vector<8x1xf32>
    %150 = arith.addf %148, %149 : vector<8x1xf32>
    %151 = math.rsqrt %150 : vector<8x1xf32>
    %152 = vector.broadcast %151 : vector<8x1xf32> to vector<8x128xf32>
    %153 = arith.mulf %143, %152 : vector<8x128xf32>
    %154 = vector.broadcast %134 : vector<1x128xf32> to vector<8x128xf32>
    %155 = arith.mulf %153, %154 : vector<8x128xf32>
    %156 = vector.broadcast %135 : vector<1x128xf32> to vector<8x128xf32>
    %157 = arith.addf %155, %156 : vector<8x128xf32>
    %158 = math.tanh %157 : vector<8x128xf32>
    %159 = arith.mulf %103, %158 : vector<8x128xf32>
    %c0_56 = arith.constant 0 : index
    %c0_57 = arith.constant 0 : index
    %160 = vector.load %arg13[%c0_56, %c0_57] : memref<8x128xf32, #tpu.memory_space<vmem>>, vector<8x128xf32>
    tpu.vector_store %arg13[%c0_56, %c0_57], %157 {strides = array<i32>} : memref<8x128xf32, #tpu.memory_space<vmem>>, vector<8x128xf32>,
    %c0_58 = arith.constant 0 : index
    %c128_59 = arith.constant 128 : index
    %161 = vector.load %arg12[%c0_58, %c128_59] : memref<8x256xf32, #tpu.memory_space<vmem>>, vector<8x128xf32>
    tpu.vector_store %arg12[%c0_58, %c128_59], %159 {strides = array<i32>} : memref<8x256xf32, #tpu.memory_space<vmem>>, vector<8x128xf32>,
    %c0_60 = arith.constant 0 : index
    %c0_61 = arith.constant 0 : index
    %c0_62 = arith.constant 0 : index
    %162 = vector.load %arg10[%c0_60, %c0_61, %c0_62] : memref<1x8x128xf32, #tpu.memory_space<vmem>>, vector<1x8x128xf32>
    %163 = vector.shape_cast %162 : vector<1x8x128xf32> to vector<8x128xf32>
    %164 = vector.shape_cast %159 : vector<8x128xf32> to vector<1x8x128xf32>
    tpu.vector_store %arg10[%c0_60, %c0_61, %c0_62], %164 {strides = array<i32>} : memref<1x8x128xf32, #tpu.memory_space<vmem>>, vector<1x8x128xf32>,
    %c0_i32_63 = arith.constant 0 : i32
    %165 = arith.cmpi eq, %arg1, %c0_i32_63 : i32
    %166 = arith.extui %165 : i1 to i32
    %c0_i32_64 = arith.constant 0 : i32
    %167 = arith.cmpi ne, %166, %c0_i32_64 : i32
    scf.if %167 {
      %c0_65 = arith.constant 0 : index
      %c0_66 = arith.constant 0 : index
      %168 = vector.load %arg11[%c0_65, %c0_66] : memref<8x128xf32, #tpu.memory_space<vmem>>, vector<8x128xf32>
      tpu.vector_store %arg11[%c0_65, %c0_66], %157 {strides = array<i32>} : memref<8x128xf32, #tpu.memory_space<vmem>>, vector<8x128xf32>,
    } else {
    }
    return
  }
  func.func @transform_0(%arg0: i32, %arg1: i32) -> (i32, i32, i32) {
    %c0_i32 = arith.constant 0 : i32
    %c0_i32_0 = arith.constant 0 : i32
    return %arg1, %arg0, %c0_i32 : i32, i32, i32
  }
  func.func @transform_1(%arg0: i32, %arg1: i32) -> (i32, i32) {
    %c0_i32 = arith.constant 0 : i32
    %c0_i32_0 = arith.constant 0 : i32
    return %arg0, %c0_i32 : i32, i32
  }
  func.func @transform_2(%arg0: i32, %arg1: i32) -> (i32, i32) {
    %c0_i32 = arith.constant 0 : i32
    %c0_i32_0 = arith.constant 0 : i32
    return %arg0, %c0_i32 : i32, i32
  }
  func.func @transform_3(%arg0: i32, %arg1: i32) -> (i32, i32) {
    %c0_i32 = arith.constant 0 : i32
    %c0_i32_0 = arith.constant 0 : i32
    %c0_i32_1 = arith.constant 0 : i32
    return %c0_i32, %c0_i32_0 : i32, i32
  }
  func.func @transform_4(%arg0: i32, %arg1: i32) -> (i32, i32) {
    %c0_i32 = arith.constant 0 : i32
    %c0_i32_0 = arith.constant 0 : i32
    %c0_i32_1 = arith.constant 0 : i32
    return %c0_i32, %c0_i32_0 : i32, i32
  }
  func.func @transform_5(%arg0: i32, %arg1: i32) -> (i32, i32) {
    %c0_i32 = arith.constant 0 : i32
    %c0_i32_0 = arith.constant 0 : i32
    %c0_i32_1 = arith.constant 0 : i32
    return %c0_i32, %c0_i32_0 : i32, i32
  }
  func.func @transform_6(%arg0: i32, %arg1: i32) -> (i32, i32) {
    %c0_i32 = arith.constant 0 : i32
    %c0_i32_0 = arith.constant 0 : i32
    %c0_i32_1 = arith.constant 0 : i32
    return %c0_i32, %c0_i32_0 : i32, i32
  }
  func.func @transform_7(%arg0: i32, %arg1: i32) -> (i32, i32) {
    %c0_i32 = arith.constant 0 : i32
    %c0_i32_0 = arith.constant 0 : i32
    %c0_i32_1 = arith.constant 0 : i32
    return %c0_i32, %c0_i32_0 : i32, i32
  }
  func.func @transform_8(%arg0: i32, %arg1: i32) -> (i32, i32, i32) {
    %c0_i32 = arith.constant 0 : i32
    %c0_i32_0 = arith.constant 0 : i32
    return %arg1, %arg0, %c0_i32 : i32, i32, i32
  }
  func.func @transform_9(%arg0: i32, %arg1: i32) -> (i32, i32) {
    %c0_i32 = arith.constant 0 : i32
    %c0_i32_0 = arith.constant 0 : i32
    return %arg0, %c0_i32 : i32, i32
  }
}

</mosaic_0001>

<llo_original>
// kernel: tpu_custom_call.1
$region0: #{tpu_custom_call.1}
  #allocation0 [shape = 'u32[]', space=smem, size = 0x4, offset = 0x4, fixed_abs, tag = 'smem constant byte address 0x4 - core index']
  #allocation1 [shape = 'u32[144,128]{1,0:T(1,128)}', space=vmem, size = 0x12000, scoped, tag = 'internal scratch']
  #allocation2 [shape = 'f32[8,256]{1,0:T(8,128)}', space=vmem, size = 0x2000, scoped, tag = 'scratch operand']
  #allocation3 [shape = 'f32[8,128]{1,0:T(8,128)}', space=vmem, size = 0x1000, scoped, tag = 'scratch operand']
  %s0 = inlined_call_operand.hbm [shape: f32[1,8,128], index: 0, kind: input, shape index: {}]
  %s1 = inlined_call_operand.hbm [shape: f32[8,128], index: 1, kind: input, shape index: {}]
  %s2 = inlined_call_operand.hbm [shape: f32[8,128], index: 2, kind: input, shape index: {}]
  %s3 = inlined_call_operand.hbm [shape: f32[256,512], index: 3, kind: input, shape index: {}]
  %s4 = inlined_call_operand.vmem [shape: f32[1,512], index: 4, kind: input, shape index: {}]
  %s5 = inlined_call_operand.vmem [shape: f32[1,512], index: 5, kind: input, shape index: {}]
  %s6 = inlined_call_operand.vmem [shape: f32[1,128], index: 6, kind: input, shape index: {}]
  %s7 = inlined_call_operand.vmem [shape: f32[1,128], index: 7, kind: input, shape index: {}]
  %s8 = inlined_call_operand.hbm [shape: f32[1,8,128], index: 8, kind: output, shape index: {0}]
  %s9 = inlined_call_operand.hbm [shape: f32[8,128], index: 9, kind: output, shape index: {1}]
  %10 = xla_tuple %s8, %s9
  %s11 = sld [smem:[#allocation0]]
  $region74: #{tpu_custom_call.1} parent=0
    _
  %s13 = ssub.s32 1, %s11
  %s14 = scalar_select 0, %s13, %s11
  $region1: #{tpu_custom_call.1} parent=0
    #allocation4 [shape = 'u8[4096]{0}', space=vmem, size = 0x1000, scoped, tag = 'input window, operand 0, single buffered']
    #allocation5 [shape = 's32[1]{0}', space=sflag, size = 0x4, scoped, tag = 'scoped memory for tpu_custom_call.1']
    #allocation6 [shape = 's32[1]{0}', space=sflag, size = 0x4, scoped, tag = 'scoped memory for tpu_custom_call.1']
    #allocation7 [shape = 'u8[4096]{0}', space=vmem, size = 0x1000, scoped, tag = 'input window, operand 1, single buffered']
    #allocation8 [shape = 's32[1]{0}', space=sflag, size = 0x4, scoped, tag = 'scoped memory for tpu_custom_call.1']
    #allocation9 [shape = 'u8[4096]{0}', space=vmem, size = 0x1000, scoped, tag = 'input window, operand 2, single buffered']
    #allocation10 [shape = 'u8[524288]{0}', space=vmem, size = 0x80000, scoped, tag = 'input window, operand 3, single buffered']
    #allocation11 [shape = 's32[1]{0}', space=sflag, size = 0x4, scoped, tag = 'scoped memory for tpu_custom_call.1']
    #allocation12 [shape = 'u8[4096]{0}', space=vmem, size = 0x1000, scoped, tag = 'output window, operand 0, single buffered']
    #allocation13 [shape = 'u8[4096]{0}', space=vmem, size = 0x1000, scoped, tag = 'output window, operand 1, single buffered']
    #allocation14 [shape = 's32[1]{0}', space=sflag, size = 0x4, scoped, tag = 'scoped memory for tpu_custom_call.1']
    %15 = vsyncpa [#allocation5], 0
    %16 = vsyncpa [#allocation8], 0
    %17 = vsyncpa [#allocation11], 0
    %18 = vsyncpa [#allocation6], 0
    %19 = vsyncpa [#allocation14], 0
    // Predicated region
    $region2: #{tpu_custom_call.1} parent=1 // pred_check
      _
    $region3: #{tpu_custom_call.1} parent=1 // pred_check_branch
      %21 = sbr.rel (0) target = $region5
    $region4: #{tpu_custom_call.1} parent=1 // pred_region
      %s23 = ssub.s32 128, 128
      %24 = vsyncadd [#allocation5], %s23
      %s26 = sshll.u32 [#allocation4], 4
      %s27 = int_to_ptr.vmem [resolvable:$true] %s26
      %29 = dma.hbm_to_vmem [thread:$0]  %s0, 128, %s27, [#allocation5]
    $region5: #{tpu_custom_call.1} parent=1 // pred_fallthru
      _
    // Predicated region
    $region6: #{tpu_custom_call.1} parent=1 // pred_check
      _
    $region7: #{tpu_custom_call.1} parent=1 // pred_check_branch
      %31 = sbr.rel (0) target = $region9
    $region8: #{tpu_custom_call.1} parent=1 // pred_region
      %s33 = ssub.s32 128, 128
      %34 = vsyncadd [#allocation8], %s33
      %s36 = sshll.u32 [#allocation7], 4
      %s37 = int_to_ptr.vmem [resolvable:$true] %s36
      %39 = dma.hbm_to_vmem [thread:$0]  %s1, 128, %s37, [#allocation8]
    $region9: #{tpu_custom_call.1} parent=1 // pred_fallthru
      _
    // Predicated region
    $region10: #{tpu_custom_call.1} parent=1 // pred_check
      _
    $region11: #{tpu_custom_call.1} parent=1 // pred_check_branch
      %41 = sbr.rel (0) target = $region13
    $region12: #{tpu_custom_call.1} parent=1 // pred_region
      %s43 = ssub.s32 128, 128
      %44 = vsyncadd [#allocation8], %s43
      %s46 = sshll.u32 [#allocation9], 4
      %s47 = int_to_ptr.vmem [resolvable:$true] %s46
      %49 = dma.hbm_to_vmem [thread:$0]  %s2, 128, %s47, [#allocation8]
    $region13: #{tpu_custom_call.1} parent=1 // pred_fallthru
      _
    // Predicated region
    $region14: #{tpu_custom_call.1} parent=1 // pred_check
      _
    $region15: #{tpu_custom_call.1} parent=1 // pred_check_branch
      %51 = sbr.rel (0) target = $region17
    $region16: #{tpu_custom_call.1} parent=1 // pred_region
      %s53 = ssub.s32 16384, 16384
      %54 = vsyncadd [#allocation11], %s53
      %s55 = sshll.u32 [#allocation10], 4
      %s56 = int_to_ptr.vmem [resolvable:$true] %s55
      %61 = dma.hbm_to_vmem [thread:$0]  %s3, 16384, %s56, [#allocation11], 512, 512, 32
    $region17: #{tpu_custom_call.1} parent=1 // pred_fallthru
      _
    // Predicated region
    $region18: #{tpu_custom_call.1} parent=1 // pred_check
      _
    $region19: #{tpu_custom_call.1} parent=1 // pred_check_branch
      %63 = sbr.rel (0) target = $region21
    $region20: #{tpu_custom_call.1} parent=1 // pred_region
      _
    $region21: #{tpu_custom_call.1} parent=1 // pred_fallthru
      _
    // Predicated region
    $region22: #{tpu_custom_call.1} parent=1 // pred_check
      _
    $region23: #{tpu_custom_call.1} parent=1 // pred_check_branch
      %65 = sbr.rel (0) target = $region25
    $region24: #{tpu_custom_call.1} parent=1 // pred_region
      _
    $region25: #{tpu_custom_call.1} parent=1 // pred_fallthru
      _
    // Predicated region
    $region26: #{tpu_custom_call.1} parent=1 // pred_check
      _
    $region27: #{tpu_custom_call.1} parent=1 // pred_check_branch
      %67 = sbr.rel (0) target = $region29
    $region28: #{tpu_custom_call.1} parent=1 // pred_region
      _
    $region29: #{tpu_custom_call.1} parent=1 // pred_fallthru
      _
    // Predicated region
    $region30: #{tpu_custom_call.1} parent=1 // pred_check
      _
    $region31: #{tpu_custom_call.1} parent=1 // pred_check_branch
      %69 = sbr.rel (0) target = $region33
    $region32: #{tpu_custom_call.1} parent=1 // pred_region
      _
    $region33: #{tpu_custom_call.1} parent=1 // pred_fallthru
      _
    // Predicated region
    $region34: #{tpu_custom_call.1} parent=1 // pred_check
      _
    $region35: #{tpu_custom_call.1} parent=1 // pred_check_branch
      %71 = sbr.rel (0) target = $region37
    $region36: #{tpu_custom_call.1} parent=1 // pred_region
      %72 = dma.done [#allocation5], 128
    $region37: #{tpu_custom_call.1} parent=1 // pred_fallthru
      _
    // Predicated region
    $region38: #{tpu_custom_call.1} parent=1 // pred_check
      _
    $region39: #{tpu_custom_call.1} parent=1 // pred_check_branch
      %74 = sbr.rel (0) target = $region41
    $region40: #{tpu_custom_call.1} parent=1 // pred_region
      %75 = dma.done [#allocation8], 128
    $region41: #{tpu_custom_call.1} parent=1 // pred_fallthru
      _
    // Predicated region
    $region42: #{tpu_custom_call.1} parent=1 // pred_check
      _
    $region43: #{tpu_custom_call.1} parent=1 // pred_check_branch
      %77 = sbr.rel (0) target = $region45
    $region44: #{tpu_custom_call.1} parent=1 // pred_region
      %78 = dma.done [#allocation8], 128
    $region45: #{tpu_custom_call.1} parent=1 // pred_fallthru
      _
    // Predicated region
    $region46: #{tpu_custom_call.1} parent=1 // pred_check
      _
    $region47: #{tpu_custom_call.1} parent=1 // pred_check_branch
      %80 = sbr.rel (0) target = $region49
    $region48: #{tpu_custom_call.1} parent=1 // pred_region
      %81 = dma.done [#allocation11], 16384
    $region49: #{tpu_custom_call.1} parent=1 // pred_fallthru
      _
    %v82 = vlaneseq
    %v83 = vand.u32 %v82, 127
    %vm84 = vcmp.lt.s32.totalorder %v83, 32
    %v85 = vsel %vm84, 1, 0
    %v86 = vcvt.s32.f32 %v85
    %p87 = scmp.eq.s32.totalorder 0, 0
    // Predicated region
    $region50: #{tpu_custom_call.1} parent=1 // pred_check
      %p88 = pneg %p87
    $region51: #{tpu_custom_call.1} parent=1 // pred_check_branch
      %90 = sbr.rel (%p88) target = $region53
    $region52: #{tpu_custom_call.1} parent=1 // pred_region
      %v91 = vld [vmem:[#allocation7] sm:$0xff]
      %92 = vst [vmem:[#allocation2 + $0x8] sm:$0xff] %v91
      %v93 = vld [vmem:[#allocation9] sm:$0xff]
      %94 = vst [vmem:[#allocation3] sm:$0xff] %v93
    $region53: #{tpu_custom_call.1} parent=1 // pred_fallthru
      _
    %v95 = vld [vmem:[#allocation4] sm:$0xff]
    %96 = vst [vmem:[#allocation2] sm:$0xff] %v95
    %v97 = vld [vmem:[#allocation2] sm:$0xff]
    %v98 = vld [vmem:[#allocation2 + $0x8] sm:$0xff]
    %v99 = vld [vmem:[#allocation10] sm:$0xff]
    %v100 = vld [vmem:[#allocation10 + $0x8] sm:$0xff]
    %v101 = vld [vmem:[#allocation10 + $0x10] sm:$0xff]
    %v102 = vld [vmem:[#allocation10 + $0x18] sm:$0xff]
    %v103 = vld [vmem:[#allocation10 + $0x20] sm:$0xff]
    %v104 = vld [vmem:[#allocation10 + $0x28] sm:$0xff]
    %v105 = vld [vmem:[#allocation10 + $0x30] sm:$0xff]
    %v106 = vld [vmem:[#allocation10 + $0x38] sm:$0xff]
    %v107 = vld [vmem:[#allocation10 + $0x40] sm:$0xff]
    %v108 = vld [vmem:[#allocation10 + $0x48] sm:$0xff]
    %v109 = vld [vmem:[#allocation10 + $0x50] sm:$0xff]
    %v110 = vld [vmem:[#allocation10 + $0x58] sm:$0xff]
    %v111 = vld [vmem:[#allocation10 + $0x60] sm:$0xff]
    %v112 = vld [vmem:[#allocation10 + $0x68] sm:$0xff]
    %v113 = vld [vmem:[#allocation10 + $0x70] sm:$0xff]
    %v114 = vld [vmem:[#allocation10 + $0x78] sm:$0xff]
    %v115 = vld [vmem:[#allocation10 + $0x80] sm:$0xff]
    %v116 = vld [vmem:[#allocation10 + $0x88] sm:$0xff]
    %v117 = vld [vmem:[#allocation10 + $0x90] sm:$0xff]
    %v118 = vld [vmem:[#allocation10 + $0x98] sm:$0xff]
    %v119 = vld [vmem:[#allocation10 + $0xa0] sm:$0xff]
    %v120 = vld [vmem:[#allocation10 + $0xa8] sm:$0xff]
    %v121 = vld [vmem:[#allocation10 + $0xb0] sm:$0xff]
    %v122 = vld [vmem:[#allocation10 + $0xb8] sm:$0xff]
    %v123 = vld [vmem:[#allocation10 + $0xc0] sm:$0xff]
    %v124 = vld [vmem:[#allocation10 + $0xc8] sm:$0xff]
    %v125 = vld [vmem:[#allocation10 + $0xd0] sm:$0xff]
    %v126 = vld [vmem:[#allocation10 + $0xd8] sm:$0xff]
    %v127 = vld [vmem:[#allocation10 + $0xe0] sm:$0xff]
    %v128 = vld [vmem:[#allocation10 + $0xe8] sm:$0xff]
    %v129 = vld [vmem:[#allocation10 + $0xf0] sm:$0xff]
    %v130 = vld [vmem:[#allocation10 + $0xf8] sm:$0xff]
    %v131 = vld [vmem:[#allocation10 + $0x100] sm:$0xff]
    %v132 = vld [vmem:[#allocation10 + $0x108] sm:$0xff]
    %v133 = vld [vmem:[#allocation10 + $0x110] sm:$0xff]
    %v134 = vld [vmem:[#allocation10 + $0x118] sm:$0xff]
    %v135 = vld [vmem:[#allocation10 + $0x120] sm:$0xff]
    %v136 = vld [vmem:[#allocation10 + $0x128] sm:$0xff]
    %v137 = vld [vmem:[#allocation10 + $0x130] sm:$0xff]
    %v138 = vld [vmem:[#allocation10 + $0x138] sm:$0xff]
    %v139 = vld [vmem:[#allocation10 + $0x140] sm:$0xff]
    %v140 = vld [vmem:[#allocation10 + $0x148] sm:$0xff]
    %v141 = vld [vmem:[#allocation10 + $0x150] sm:$0xff]
    %v142 = vld [vmem:[#allocation10 + $0x158] sm:$0xff]
    %v143 = vld [vmem:[#allocation10 + $0x160] sm:$0xff]
    %v144 = vld [vmem:[#allocation10 + $0x168] sm:$0xff]
    %v145 = vld [vmem:[#allocation10 + $0x170] sm:$0xff]
    %v146 = vld [vmem:[#allocation10 + $0x178] sm:$0xff]
    %v147 = vld [vmem:[#allocation10 + $0x180] sm:$0xff]
    %v148 = vld [vmem:[#allocation10 + $0x188] sm:$0xff]
    %v149 = vld [vmem:[#allocation10 + $0x190] sm:$0xff]
    %v150 = vld [vmem:[#allocation10 + $0x198] sm:$0xff]
    %v151 = vld [vmem:[#allocation10 + $0x1a0] sm:$0xff]
    %v152 = vld [vmem:[#allocation10 + $0x1a8] sm:$0xff]
    %v153 = vld [vmem:[#allocation10 + $0x1b0] sm:$0xff]
    %v154 = vld [vmem:[#allocation10 + $0x1b8] sm:$0xff]
    %v155 = vld [vmem:[#allocation10 + $0x1c0] sm:$0xff]
    %v156 = vld [vmem:[#allocation10 + $0x1c8] sm:$0xff]
    %v157 = vld [vmem:[#allocation10 + $0x1d0] sm:$0xff]
    %v158 = vld [vmem:[#allocation10 + $0x1d8] sm:$0xff]
    %v159 = vld [vmem:[#allocation10 + $0x1e0] sm:$0xff]
    %v160 = vld [vmem:[#allocation10 + $0x1e8] sm:$0xff]
    %v161 = vld [vmem:[#allocation10 + $0x1f0] sm:$0xff]
    %v162 = vld [vmem:[#allocation10 + $0x1f8] sm:$0xff]
    %v163 = vld [vmem:[#allocation10 + $0x200] sm:$0xff]
    %v164 = vld [vmem:[#allocation10 + $0x208] sm:$0xff]
    %v165 = vld [vmem:[#allocation10 + $0x210] sm:$0xff]
    %v166 = vld [vmem:[#allocation10 + $0x218] sm:$0xff]
    %v167 = vld [vmem:[#allocation10 + $0x220] sm:$0xff]
    %v168 = vld [vmem:[#allocation10 + $0x228] sm:$0xff]
    %v169 = vld [vmem:[#allocation10 + $0x230] sm:$0xff]
    %v170 = vld [vmem:[#allocation10 + $0x238] sm:$0xff]
    %v171 = vld [vmem:[#allocation10 + $0x240] sm:$0xff]
    %v172 = vld [vmem:[#allocation10 + $0x248] sm:$0xff]
    %v173 = vld [vmem:[#allocation10 + $0x250] sm:$0xff]
    %v174 = vld [vmem:[#allocation10 + $0x258] sm:$0xff]
    %v175 = vld [vmem:[#allocation10 + $0x260] sm:$0xff]
    %v176 = vld [vmem:[#allocation10 + $0x268] sm:$0xff]
    %v177 = vld [vmem:[#allocation10 + $0x270] sm:$0xff]
    %v178 = vld [vmem:[#allocation10 + $0x278] sm:$0xff]
    %v179 = vld [vmem:[#allocation10 + $0x280] sm:$0xff]
    %v180 = vld [vmem:[#allocation10 + $0x288] sm:$0xff]
    %v181 = vld [vmem:[#allocation10 + $0x290] sm:$0xff]
    %v182 = vld [vmem:[#allocation10 + $0x298] sm:$0xff]
    %v183 = vld [vmem:[#allocation10 + $0x2a0] sm:$0xff]
    %v184 = vld [vmem:[#allocation10 + $0x2a8] sm:$0xff]
    %v185 = vld [vmem:[#allocation10 + $0x2b0] sm:$0xff]
    %v186 = vld [vmem:[#allocation10 + $0x2b8] sm:$0xff]
    %v187 = vld [vmem:[#allocation10 + $0x2c0] sm:$0xff]
    %v188 = vld [vmem:[#allocation10 + $0x2c8] sm:$0xff]
    %v189 = vld [vmem:[#allocation10 + $0x2d0] sm:$0xff]
    %v190 = vld [vmem:[#allocation10 + $0x2d8] sm:$0xff]
    %v191 = vld [vmem:[#allocation10 + $0x2e0] sm:$0xff]
    %v192 = vld [vmem:[#allocation10 + $0x2e8] sm:$0xff]
    %v193 = vld [vmem:[#allocation10 + $0x2f0] sm:$0xff]
    %v194 = vld [vmem:[#allocation10 + $0x2f8] sm:$0xff]
    %v195 = vld [vmem:[#allocation10 + $0x300] sm:$0xff]
    %v196 = vld [vmem:[#allocation10 + $0x308] sm:$0xff]
    %v197 = vld [vmem:[#allocation10 + $0x310] sm:$0xff]
    %v198 = vld [vmem:[#allocation10 + $0x318] sm:$0xff]
    %v199 = vld [vmem:[#allocation10 + $0x320] sm:$0xff]
    %v200 = vld [vmem:[#allocation10 + $0x328] sm:$0xff]
    %v201 = vld [vmem:[#allocation10 + $0x330] sm:$0xff]
    %v202 = vld [vmem:[#allocation10 + $0x338] sm:$0xff]
    %v203 = vld [vmem:[#allocation10 + $0x340] sm:$0xff]
    %v204 = vld [vmem:[#allocation10 + $0x348] sm:$0xff]
    %v205 = vld [vmem:[#allocation10 + $0x350] sm:$0xff]
    %v206 = vld [vmem:[#allocation10 + $0x358] sm:$0xff]
    %v207 = vld [vmem:[#allocation10 + $0x360] sm:$0xff]
    %v208 = vld [vmem:[#allocation10 + $0x368] sm:$0xff]
    %v209 = vld [vmem:[#allocation10 + $0x370] sm:$0xff]
    %v210 = vld [vmem:[#allocation10 + $0x378] sm:$0xff]
    %v211 = vld [vmem:[#allocation10 + $0x380] sm:$0xff]
    %v212 = vld [vmem:[#allocation10 + $0x388] sm:$0xff]
    %v213 = vld [vmem:[#allocation10 + $0x390] sm:$0xff]
    %v214 = vld [vmem:[#allocation10 + $0x398] sm:$0xff]
    %v215 = vld [vmem:[#allocation10 + $0x3a0] sm:$0xff]
    %v216 = vld [vmem:[#allocation10 + $0x3a8] sm:$0xff]
    %v217 = vld [vmem:[#allocation10 + $0x3b0] sm:$0xff]
    %v218 = vld [vmem:[#allocation10 + $0x3b8] sm:$0xff]
    %v219 = vld [vmem:[#allocation10 + $0x3c0] sm:$0xff]
    %v220 = vld [vmem:[#allocation10 + $0x3c8] sm:$0xff]
    %v221 = vld [vmem:[#allocation10 + $0x3d0] sm:$0xff]
    %v222 = vld [vmem:[#allocation10 + $0x3d8] sm:$0xff]
    %v223 = vld [vmem:[#allocation10 + $0x3e0] sm:$0xff]
    %v224 = vld [vmem:[#allocation10 + $0x3e8] sm:$0xff]
    %v225 = vld [vmem:[#allocation10 + $0x3f0] sm:$0xff]
    %v226 = vld [vmem:[#allocation10 + $0x3f8] sm:$0xff]
    %227 = vmatprep.subr.mxu0 %v100
    %228 = vmatpush1.msra.mxu0 %v99
    %229 = vmatprep.subr.mxu0 %v104
    %230 = vmatpush1.msra.mxu0 %v103
    %231 = vmatprep.subr.mxu0 %v108
    %232 = vmatpush1.msra.mxu0 %v107
    %233 = vmatprep.subr.mxu0 %v112
    %234 = vmatpush1.msra.mxu0 %v111
    %235 = vmatprep.subr.mxu0 %v116
    %236 = vmatpush1.msra.mxu0 %v115
    %237 = vmatprep.subr.mxu0 %v120
    %238 = vmatpush1.msra.mxu0 %v119
    %239 = vmatprep.subr.mxu0 %v124
    %240 = vmatpush1.msra.mxu0 %v123
    %241 = vmatprep.subr.mxu0 %v128
    %242 = vmatpush1.msra.mxu0 %v127
    %243 = vmatprep.subr.mxu0 %v132
    %244 = vmatpush1.msra.mxu0 %v131
    %245 = vmatprep.subr.mxu0 %v136
    %246 = vmatpush1.msra.mxu0 %v135
    %247 = vmatprep.subr.mxu0 %v140
    %248 = vmatpush1.msra.mxu0 %v139
    %249 = vmatprep.subr.mxu0 %v144
    %250 = vmatpush1.msra.mxu0 %v143
    %251 = vmatprep.subr.mxu0 %v148
    %252 = vmatpush1.msra.mxu0 %v147
    %253 = vmatprep.subr.mxu0 %v152
    %254 = vmatpush1.msra.mxu0 %v151
    %255 = vmatprep.subr.mxu0 %v156
    %256 = vmatpush1.msra.mxu0 %v155
    %257 = vmatprep.subr.mxu0 %v160
    %258 = vmatpush1.msra.mxu0 %v159
    %259 = vmatprep.subr.mxu0 %v164
    %260 = vmatpush1.msra.mxu0 %v163
    %261 = vmatprep.subr.mxu0 %v168
    %262 = vmatpush1.msra.mxu0 %v167
    %263 = vmatprep.subr.mxu0 %v172
    %264 = vmatpush1.msra.mxu0 %v171
    %265 = vmatprep.subr.mxu0 %v176
    %266 = vmatpush1.msra.mxu0 %v175
    %267 = vmatprep.subr.mxu0 %v180
    %268 = vmatpush1.msra.mxu0 %v179
    %269 = vmatprep.subr.mxu0 %v184
    %270 = vmatpush1.msra.mxu0 %v183
    %271 = vmatprep.subr.mxu0 %v188
    %272 = vmatpush1.msra.mxu0 %v187
    %273 = vmatprep.subr.mxu0 %v192
    %274 = vmatpush1.msra.mxu0 %v191
    %275 = vmatprep.subr.mxu0 %v196
    %276 = vmatpush1.msra.mxu0 %v195
    %277 = vmatprep.subr.mxu0 %v200
    %278 = vmatpush1.msra.mxu0 %v199
    %279 = vmatprep.subr.mxu0 %v204
    %280 = vmatpush1.msra.mxu0 %v203
    %281 = vmatprep.subr.mxu0 %v208
    %282 = vmatpush1.msra.mxu0 %v207
    %283 = vmatprep.subr.mxu0 %v212
    %284 = vmatpush1.msra.mxu0 %v211
    %285 = vmatprep.subr.mxu0 %v216
    %286 = vmatpush1.msra.mxu0 %v215
    %287 = vmatprep.subr.mxu0 %v220
    %288 = vmatpush1.msra.mxu0 %v219
    %289 = vmatprep.subr.mxu0 %v224
    %290 = vmatpush1.msra.mxu0 %v223
    %291 = vmatprep.mubr.f32.mxu0 %v98
    %292 = vmatmul.mubr.f32.gmra.mrb[0].mxu0 %v97
    %v293 = vpop.f32.mrb[0].mxu0
    %v294 = vadd.f32 0.0, %v293
    %v295 = vpop.f32.mrb[0].mxu0
    %v296 = vadd.f32 0.0, %v295
    %297 = vdwg.mxu0
    %298 = vmatprep.subr.mxu0 %v102
    %299 = vmatpush1.msra.mxu0 %v101
    %300 = vmatprep.subr.mxu0 %v106
    %301 = vmatpush1.msra.mxu0 %v105
    %302 = vmatprep.subr.mxu0 %v110
    %303 = vmatpush1.msra.mxu0 %v109
    %304 = vmatprep.subr.mxu0 %v114
    %305 = vmatpush1.msra.mxu0 %v113
    %306 = vmatprep.subr.mxu0 %v118
    %307 = vmatpush1.msra.mxu0 %v117
    %308 = vmatprep.subr.mxu0 %v122
    %309 = vmatpush1.msra.mxu0 %v121
    %310 = vmatprep.subr.mxu0 %v126
    %311 = vmatpush1.msra.mxu0 %v125
    %312 = vmatprep.subr.mxu0 %v130
    %313 = vmatpush1.msra.mxu0 %v129
    %314 = vmatprep.subr.mxu0 %v134
    %315 = vmatpush1.msra.mxu0 %v133
    %316 = vmatprep.subr.mxu0 %v138
    %317 = vmatpush1.msra.mxu0 %v137
    %318 = vmatprep.subr.mxu0 %v142
    %319 = vmatpush1.msra.mxu0 %v141
    %320 = vmatprep.subr.mxu0 %v146
    %321 = vmatpush1.msra.mxu0 %v145
    %322 = vmatprep.subr.mxu0 %v150
    %323 = vmatpush1.msra.mxu0 %v149
    %324 = vmatprep.subr.mxu0 %v154
    %325 = vmatpush1.msra.mxu0 %v153
    %326 = vmatprep.subr.mxu0 %v158
    %327 = vmatpush1.msra.mxu0 %v157
    %328 = vmatprep.subr.mxu0 %v162
    %329 = vmatpush1.msra.mxu0 %v161
    %330 = vmatprep.subr.mxu0 %v166
    %331 = vmatpush1.msra.mxu0 %v165
    %332 = vmatprep.subr.mxu0 %v170
    %333 = vmatpush1.msra.mxu0 %v169
    %334 = vmatprep.subr.mxu0 %v174
    %335 = vmatpush1.msra.mxu0 %v173
    %336 = vmatprep.subr.mxu0 %v178
    %337 = vmatpush1.msra.mxu0 %v177
    %338 = vmatprep.subr.mxu0 %v182
    %339 = vmatpush1.msra.mxu0 %v181
    %340 = vmatprep.subr.mxu0 %v186
    %341 = vmatpush1.msra.mxu0 %v185
    %342 = vmatprep.subr.mxu0 %v190
    %343 = vmatpush1.msra.mxu0 %v189
    %344 = vmatprep.subr.mxu0 %v194
    %345 = vmatpush1.msra.mxu0 %v193
    %346 = vmatprep.subr.mxu0 %v198
    %347 = vmatpush1.msra.mxu0 %v197
    %348 = vmatprep.subr.mxu0 %v202
    %349 = vmatpush1.msra.mxu0 %v201
    %350 = vmatprep.subr.mxu0 %v206
    %351 = vmatpush1.msra.mxu0 %v205
    %352 = vmatprep.subr.mxu0 %v210
    %353 = vmatpush1.msra.mxu0 %v209
    %354 = vmatprep.subr.mxu0 %v214
    %355 = vmatpush1.msra.mxu0 %v213
    %356 = vmatprep.subr.mxu0 %v218
    %357 = vmatpush1.msra.mxu0 %v217
    %358 = vmatprep.subr.mxu0 %v222
    %359 = vmatpush1.msra.mxu0 %v221
    %360 = vmatprep.subr.mxu0 %v226
    %361 = vmatpush1.msra.mxu0 %v225
    %362 = vmatprep.mubr.f32.mxu0 %v98
    %363 = vmatmul.mubr.f32.gmra.mrb[0].mxu0 %v97
    %v364 = vpop.f32.mrb[0].mxu0
    %v365 = vadd.f32 0.0, %v364
    %v366 = vpop.f32.mrb[0].mxu0
    %v367 = vadd.f32 0.0, %v366
    %368 = vdwg.mxu0
    %v369 = vld [vmem:[%s4] sm:$0x1]
    %v370 = vld [vmem:[%s5] sm:$0x1]
    %371 = vadd.xlane.f32.xlu0 %v294
    %v372 = vpop.xlane.xlu0 %371
    %v373 = vmul.f32 %v372, 0.03125
    %v374 = vsub.f32 %v294, %v373
    %v375 = vmul.f32 %v374, %v86
    %v376 = vmul.f32 %v375, %v375
    %377 = vadd.xlane.f32.xlu0 %v376
    %v378 = vpop.xlane.xlu0 %377
    %v379 = vmul.f32 %v378, 0.03125
    %v380 = vadd.f32 %v379, 1e-05
    %v381 = vrsqrt.pop %v380
    %v382 = vmul.f32 %v375, %v381
    %v384 = vlaneseq
    %v385 = vshrl.u32 %v384, 7
    %v386 = vsub.s32 0, %v385
    %v387 = vrot.slane %v369, %v386
    %v389 = vmul.f32 %v382, %v387
    %v391 = vlaneseq
    %v392 = vshrl.u32 %v391, 7
    %v393 = vsub.s32 0, %v392
    %v394 = vrot.slane %v370, %v393
    %v396 = vadd.f32 %v389, %v394
    %v397 = vxor.u32 %v396, 2147483648
    %v398 = vmul.f32 %v397, 1.442695
    %v399 = vpow.pop %v398
    %v400 = vadd.f32 %v399, 1.0
    %v401 = vrcp.pop %v400
    %v402 = vmul.f32 1.0, %v401
    %v403 = vld [vmem:[%s4 + $0x1] sm:$0x1]
    %v404 = vld [vmem:[%s5 + $0x1] sm:$0x1]
    %405 = vadd.xlane.f32.xlu0 %v296
    %v406 = vpop.xlane.xlu0 %405
    %v407 = vmul.f32 %v406, 0.03125
    %v408 = vsub.f32 %v296, %v407
    %v409 = vmul.f32 %v408, %v86
    %v410 = vmul.f32 %v409, %v409
    %411 = vadd.xlane.f32.xlu0 %v410
    %v412 = vpop.xlane.xlu0 %411
    %v413 = vmul.f32 %v412, 0.03125
    %v414 = vadd.f32 %v413, 1e-05
    %v415 = vrsqrt.pop %v414
    %v416 = vmul.f32 %v409, %v415
    %v418 = vlaneseq
    %v419 = vshrl.u32 %v418, 7
    %v420 = vsub.s32 0, %v419
    %v421 = vrot.slane %v403, %v420
    %v423 = vmul.f32 %v416, %v421
    %v425 = vlaneseq
    %v426 = vshrl.u32 %v425, 7
    %v427 = vsub.s32 0, %v426
    %v428 = vrot.slane %v404, %v427
    %v430 = vadd.f32 %v423, %v428
    %v431 = vxor.u32 %v430, 2147483648
    %v432 = vmul.f32 %v431, 1.442695
    %v433 = vpow.pop %v432
    %v434 = vadd.f32 %v433, 1.0
    %v435 = vrcp.pop %v434
    %v436 = vmul.f32 1.0, %v435
    %v437 = vld [vmem:[%s4 + $0x2] sm:$0x1]
    %v438 = vld [vmem:[%s5 + $0x2] sm:$0x1]
    %439 = vadd.xlane.f32.xlu0 %v365
    %v440 = vpop.xlane.xlu0 %439
    %v441 = vmul.f32 %v440, 0.03125
    %v442 = vsub.f32 %v365, %v441
    %v443 = vmul.f32 %v442, %v86
    %v444 = vmul.f32 %v443, %v443
    %445 = vadd.xlane.f32.xlu0 %v444
    %v446 = vpop.xlane.xlu0 %445
    %v447 = vmul.f32 %v446, 0.03125
    %v448 = vadd.f32 %v447, 1e-05
    %v449 = vrsqrt.pop %v448
    %v450 = vmul.f32 %v443, %v449
    %v452 = vlaneseq
    %v453 = vshrl.u32 %v452, 7
    %v454 = vsub.s32 0, %v453
    %v455 = vrot.slane %v437, %v454
    %v457 = vmul.f32 %v450, %v455
    %v459 = vlaneseq
    %v460 = vshrl.u32 %v459, 7
    %v461 = vsub.s32 0, %v460
    %v462 = vrot.slane %v438, %v461
    %v464 = vadd.f32 %v457, %v462
    %v465 = vxor.u32 %v464, 2147483648
    %v466 = vmul.f32 %v465, 1.442695
    %v467 = vpow.pop %v466
    %v468 = vadd.f32 %v467, 1.0
    %v469 = vrcp.pop %v468
    %v470 = vmul.f32 1.0, %v469
    %v471 = vld [vmem:[%s4 + $0x3] sm:$0x1]
    %v472 = vld [vmem:[%s5 + $0x3] sm:$0x1]
    %473 = vadd.xlane.f32.xlu0 %v367
    %v474 = vpop.xlane.xlu0 %473
    %v475 = vmul.f32 %v474, 0.03125
    %v476 = vsub.f32 %v367, %v475
    %v477 = vmul.f32 %v476, %v86
    %v478 = vmul.f32 %v477, %v477
    %479 = vadd.xlane.f32.xlu0 %v478
    %v480 = vpop.xlane.xlu0 %479
    %v481 = vmul.f32 %v480, 0.03125
    %v482 = vadd.f32 %v481, 1e-05
    %v483 = vrsqrt.pop %v482
    %v484 = vmul.f32 %v477, %v483
    %v486 = vlaneseq
    %v487 = vshrl.u32 %v486, 7
    %v488 = vsub.s32 0, %v487
    %v489 = vrot.slane %v471, %v488
    %v491 = vmul.f32 %v484, %v489
    %v493 = vlaneseq
    %v494 = vshrl.u32 %v493, 7
    %v495 = vsub.s32 0, %v494
    %v496 = vrot.slane %v472, %v495
    %v498 = vadd.f32 %v491, %v496
    %v499 = vtanh.pop %v498
    %v500 = vmul.f32 %v436, %v499
    %v501 = vld [vmem:[#allocation3] sm:$0xff]
    %v502 = vmul.f32 %v402, %v501
    %v503 = vadd.f32 %v500, %v502
    %v504 = vld [vmem:[%s6] sm:$0x1]
    %v505 = vld [vmem:[%s7] sm:$0x1]
    %506 = vadd.xlane.f32.xlu0 %v503
    %v507 = vpop.xlane.xlu0 %506
    %v508 = vmul.f32 %v507, 0.03125
    %v509 = vsub.f32 %v503, %v508
    %v510 = vmul.f32 %v509, %v86
    %v511 = vmul.f32 %v510, %v510
    %512 = vadd.xlane.f32.xlu0 %v511
    %v513 = vpop.xlane.xlu0 %512
    %v514 = vmul.f32 %v513, 0.03125
    %v515 = vadd.f32 %v514, 1e-05
    %v516 = vrsqrt.pop %v515
    %v517 = vmul.f32 %v510, %v516
    %v519 = vlaneseq
    %v520 = vshrl.u32 %v519, 7
    %v521 = vsub.s32 0, %v520
    %v522 = vrot.slane %v504, %v521
    %v524 = vmul.f32 %v517, %v522
    %v526 = vlaneseq
    %v527 = vshrl.u32 %v526, 7
    %v528 = vsub.s32 0, %v527
    %v529 = vrot.slane %v505, %v528
    %v531 = vadd.f32 %v524, %v529
    %v532 = vtanh.pop %v531
    %v533 = vmul.f32 %v470, %v532
    %534 = vst [vmem:[#allocation3] sm:$0xff] %v531
    %535 = vst [vmem:[#allocation2 + $0x8] sm:$0xff] %v533
    %536 = vst [vmem:[#allocation12] sm:$0xff] %v533
    // Predicated region
    $region54: #{tpu_custom_call.1} parent=1 // pred_check
      %p537 = pneg %p87
    $region55: #{tpu_custom_call.1} parent=1 // pred_check_branch
      %539 = sbr.rel (%p537) target = $region57
    $region56: #{tpu_custom_call.1} parent=1 // pred_region
      %540 = vst [vmem:[#allocation13] sm:$0xff] %v531
    $region57: #{tpu_custom_call.1} parent=1 // pred_fallthru
      _
    // Predicated region
    $region58: #{tpu_custom_call.1} parent=1 // pred_check
      _
    $region59: #{tpu_custom_call.1} parent=1 // pred_check_branch
      %542 = sbr.rel (0) target = $region61
    $region60: #{tpu_custom_call.1} parent=1 // pred_region
      %s544 = ssub.s32 128, 128
      %545 = vsyncadd [#allocation6], %s544
      %s547 = sshll.u32 [#allocation12], 4
      %s548 = int_to_ptr.vmem [resolvable:$true] %s547
      %550 = dma.vmem_to_hbm [thread:$0]  %s548, 128, %s8, [#allocation6]
    $region61: #{tpu_custom_call.1} parent=1 // pred_fallthru
      _
    // Predicated region
    $region62: #{tpu_custom_call.1} parent=1 // pred_check
      _
    $region63: #{tpu_custom_call.1} parent=1 // pred_check_branch
      %552 = sbr.rel (0) target = $region65
    $region64: #{tpu_custom_call.1} parent=1 // pred_region
      %s554 = ssub.s32 128, 128
      %555 = vsyncadd [#allocation14], %s554
      %s557 = sshll.u32 [#allocation13], 4
      %s558 = int_to_ptr.vmem [resolvable:$true] %s557
      %560 = dma.vmem_to_hbm [thread:$0]  %s558, 128, %s9, [#allocation14]
    $region65: #{tpu_custom_call.1} parent=1 // pred_fallthru
      _
    // Predicated region
    $region66: #{tpu_custom_call.1} parent=1 // pred_check
      _
    $region67: #{tpu_custom_call.1} parent=1 // pred_check_branch
      %562 = sbr.rel (0) target = $region69
    $region68: #{tpu_custom_call.1} parent=1 // pred_region
      %563 = dma.done [#allocation6], 128
    $region69: #{tpu_custom_call.1} parent=1 // pred_fallthru
      _
    // Predicated region
    $region70: #{tpu_custom_call.1} parent=1 // pred_check
      _
    $region71: #{tpu_custom_call.1} parent=1 // pred_check_branch
      %565 = sbr.rel (0) target = $region73
    $region72: #{tpu_custom_call.1} parent=1 // pred_region
      %566 = dma.done [#allocation14], 128
    $region73: #{tpu_custom_call.1} parent=1 // pred_fallthru
      _
    %567 = vsyncpa [#allocation5], 1
    %568 = vsyncpa [#allocation8], 1
    %569 = vsyncpa [#allocation11], 1
    %570 = vsyncpa [#allocation6], 1
    %571 = vsyncpa [#allocation14], 1

</llo_original>
